<compile_context>
chip_gen: v6e
topology: v6e:2x2x1
jax: 0.10.0
libtpu: 0.0.40
codegen_flags: <defaults>
</compile_context>

<pallas_src>
import functools

import jax
import jax.numpy as jnp
from jax.experimental import pallas as pl
from jax.experimental.pallas import tpu as pltpu

# Fuzzy membership constants a, b, c, d from FuzzyMembershipFunction(0, .3, .7, 1).
FMF_A, FMF_B, FMF_C, FMF_D = 0.0, 0.3, 0.7, 1.0
INV_RISE = 1.0 / (FMF_B - FMF_A)   # precomputed multipliers (no divides in-kernel)
INV_FALL = 1.0 / (FMF_D - FMF_C)

# bf16 x bf16 -> f32 dot is only guaranteed on the real TPU MXU; the CPU
# executor used for interpret-mode testing rejects it, so upcast there.
try:
    _UPCAST_MATMUL = jax.devices()[0].platform != "tpu"
except Exception:  # pragma: no cover - be maximally defensive
    _UPCAST_MATMUL = True


def _round_up(v, m):
    return ((v + m - 1) // m) * m


def _vmem_physical_bytes():
    """Physical VMEM per TensorCore for the current generation (bytes)."""
    try:
        kind = jax.devices()[0].device_kind.lower()
    except Exception:
        kind = ""
    if "v7" in kind:
        return 64 * 1024 * 1024           # v7x: 64 MiB / TC
    if "v5" in kind or "v6" in kind:
        return 128 * 1024 * 1024          # v5e / v6e: 128 MiB
    return 64 * 1024 * 1024               # unknown / CPU interpret: conservative


def _tile_bytes(sub_dim, lane_dim, dtype):
    """VMEM bytes of one (sub_dim, lane_dim) tile incl. (sublane, lane) padding."""
    itemsize = jnp.dtype(dtype).itemsize
    sub = max(8, 32 // itemsize)          # 8 rows for f32, 16 for bf16
    return _round_up(max(sub_dim, 1), sub) * _round_up(max(lane_dim, 1), 128) * itemsize


def _fuzzy_conv_kernel(a_ref, w_ref, b_ref, o_ref, *, upcast):
    """One (batch image, spatial tile) step of the im2col matmul.

    a_ref: (K, thw)    im2col patch columns for this tile (compute dtype)
    w_ref: (Cout, K)   weight matrix (grid-invariant)
    b_ref: (Cout, 1)   f32 bias column (grid-invariant)
    o_ref: (Cout, thw) output tile, lane-dense, already in the final layout
    """
    a = a_ref[...]
    w = w_ref[...]
    if upcast:                            # static (trace-time) switch, no runtime cost
        a = a.astype(jnp.float32)
        w = w.astype(jnp.float32)
    # MXU note: the matmul N-dim is thw (>=128) and M-dim is Cout; fine while
    # HBM-bound.  If Cout/K ever grow into the compute-bound regime, also tile
    # Cout in multiples of 128/256.
    acc = jnp.dot(w, a, preferred_element_type=jnp.float32)    # (Cout, thw)
    acc = acc + b_ref[...]                                      # + (Cout, 1)
    rise = (acc - FMF_A) * INV_RISE
    fall = (FMF_D - acc) * INV_FALL
    o_ref[...] = jnp.maximum(jnp.minimum(rise, fall), 0.0).astype(o_ref.dtype)


@functools.partial(
    jax.jit,
    static_argnames=("stride", "padding", "dilation", "compute_dtype", "out_dtype"))
def fuzzy_conv2d(x, weight, bias, *, stride=1, padding=0, dilation=1,
                 compute_dtype=jnp.bfloat16, out_dtype=None):
    """x: (N, C, H, W); weight: (Cout, Cin, kh, kw); bias: (Cout,)."""
    N, C, H, W = x.shape
    Cout, Cin, kh, kw = weight.shape
    assert Cin == C, "groups != 1 not supported"   # TODO(synk): grouped conv
    out_dtype = x.dtype if out_dtype is None else out_dtype

    Ho = (H + 2 * padding - dilation * (kh - 1) - 1) // stride + 1
    Wo = (W + 2 * padding - dilation * (kw - 1) - 1) // stride + 1
    assert Ho > 0 and Wo > 0, "degenerate output spatial shape"
    K = C * kh * kw
    HoWo = Ho * Wo

    # ---- im2col glue (plain JAX), built directly in the (N, K, Ho*Wo) layout
    # the kernel consumes; cast to the compute dtype first so the patch matrix
    # is written at half width when bf16.
    # TODO(synk): fuse this into the kernel (halo DMAs from HBM) so x is read
    # roughly once instead of kh*kw times.
    xc = x.astype(compute_dtype)
    if padding:
        xc = jnp.pad(xc, ((0, 0), (0, 0), (padding, padding), (padding, padding)))
    cols = []
    for c in range(C):                    # (c, i, j) order == weight.reshape order
        for i in range(kh):
            for j in range(kw):
                hi, wj = i * dilation, j * dilation
                patch = xc[:, c,
                           hi: hi + stride * (Ho - 1) + 1: stride,
                           wj: wj + stride * (Wo - 1) + 1: stride]   # (N, Ho, Wo)
                cols.append(patch.reshape(N, HoWo))
    a = jnp.stack(cols, axis=1)                               # (N, K, Ho*Wo)
    wmat = weight.reshape(Cout, K).astype(compute_dtype)      # (Cout, K)
    bias2d = bias.reshape(Cout, 1).astype(jnp.float32)

    # ---- tile / VMEM budgeting (generation aware) ----
    vmem_phys = _vmem_physical_bytes()
    usable = (vmem_phys * 7) // 10        # headroom for Mosaic internal scratch
    # grid-invariant blocks (weight, bias), counted at the default double
    # buffering.  TODO(synk): pl.Buffered(1) would halve this.
    fixed = (2 * _tile_bytes(Cout, K, compute_dtype)
             + 2 * _tile_bytes(Cout, 1, jnp.float32))

    def tile_cost(t):
        return (fixed
                + 2 * _tile_bytes(K, t, compute_dtype)        # A double buffer
                + 2 * _tile_bytes(Cout, t, out_dtype))        # out double buffer

    # largest lane-dense spatial tile that fits the per-generation budget
    target_thw = 4096 if vmem_phys >= 128 * 1024 * 1024 else 2048
    thw = min(target_thw, _round_up(HoWo, 128))
    while thw > 128 and tile_cost(thw) > usable:
        thw -= 128
    # keep >= 4 total grid steps (>= 2 per v7x TensorCore) when possible
    while thw > 128 and N * ((HoWo + thw - 1) // thw) < 4:
        thw = max(128, ((thw // 2) // 128) * 128)

    HoWo_p = _round_up(HoWo, thw)
    if HoWo_p > HoWo:
        # only the ragged tail tile is padded; those columns compute
        # fuzzy(bias) garbage and are sliced off below (wasted work only).
        a = jnp.pad(a, ((0, 0), (0, 0), (0, HoWo_p - HoWo)))

    vmem_limit = int(min(max(2 * tile_cost(thw), 32 * 1024 * 1024), usable))

    kernel = functools.partial(_fuzzy_conv_kernel, upcast=_UPCAST_MATMUL)
    out_p = pl.pallas_call(
        kernel,
        out_shape=jax.ShapeDtypeStruct((N, Cout, HoWo_p), out_dtype),
        grid_spec=pltpu.PrefetchScalarGridSpec(
            num_scalar_prefetch=0,
            grid=(N, HoWo_p // thw),
            in_specs=[
                pl.BlockSpec((None, K, thw), lambda n, t: (n, 0, t)),   # patches
                pl.BlockSpec((Cout, K), lambda n, t: (0, 0)),           # weights
                pl.BlockSpec((Cout, 1), lambda n, t: (0, 0)),           # bias
            ],
            out_specs=pl.BlockSpec((None, Cout, thw), lambda n, t: (n, 0, t)),
        ),
        compiler_params=pltpu.CompilerParams(
            dimension_semantics=("parallel", "parallel"),
            vmem_limit_bytes=vmem_limit),
    )(a, wmat, bias2d)

    # Output already has the final (N, Cout, spatial) layout: drop the tail
    # padding (no-op when HoWo_p == HoWo) and reshape — no transpose pass.
    return out_p[:, :, :HoWo].reshape(N, Cout, Ho, Wo)


def _reference(x, weight, bias, stride, padding, dilation):
    y = jax.lax.conv_general_dilated(
        x, weight,
        window_strides=(stride, stride),
        padding=[(padding, padding), (padding, padding)],
        rhs_dilation=(dilation, dilation),
        dimension_numbers=("NCHW", "OIHW", "NCHW"),
        preferred_element_type=jnp.float32)
    y = y + bias.reshape(1, -1, 1, 1)
    rise = (y - FMF_A) / (FMF_B - FMF_A)
    fall = (FMF_D - y) / (FMF_D - FMF_C)
    return jnp.maximum(jnp.minimum(rise, fall), 0.0)


if __name__ == "__main__":
    key = jax.random.PRNGKey(0)
    kx, kw_, kb = jax.random.split(key, 3)

    # Small shapes consistent with the module: N=2, Cin=4, H=W=16, Cout=8, k=3.
    N, Cin, H, W = 2, 4, 16, 16
    Cout, ksize = 8, 3
    stride, padding, dilation = 1, 1, 1

    x = jax.random.normal(kx, (N, Cin, H, W), dtype=jnp.float32)
    # Deterministic Conv2d-style init (uniform in +/- 1/sqrt(fan_in)).
    fan_in = Cin * ksize * ksize
    bound = 1.0 / (fan_in ** 0.5)
    weight = jax.random.uniform(kw_, (Cout, Cin, ksize, ksize),
                                minval=-bound, maxval=bound, dtype=jnp.float32)
    bias = jax.random.uniform(kb, (Cout,), minval=-bound, maxval=bound,
                              dtype=jnp.float32)

    # 1) Strict structural check with f32 compute against the f32 reference.
    out_f32 = fuzzy_conv2d(x, weight, bias, stride=stride, padding=padding,
                           dilation=dilation, compute_dtype=jnp.float32)
    out_f32 = jax.block_until_ready(out_f32)
    ref_f32 = _reference(x, weight, bias, stride, padding, dilation)
    assert out_f32.shape == ref_f32.shape == (N, Cout, H, W)
    assert jnp.allclose(out_f32, ref_f32, atol=1e-4, rtol=1e-4), \
        f"f32 max abs err = {jnp.max(jnp.abs(out_f32 - ref_f32))}"

    # 2) Default bf16-storage path vs. a reference on bf16-quantized inputs
    #    (f32 accumulation), so only accumulation-order differences remain.
    out = fuzzy_conv2d(x, weight, bias, stride=stride, padding=padding,
                       dilation=dilation)
    out = jax.block_until_ready(out)
    x_q = x.astype(jnp.bfloat16).astype(jnp.float32)
    w_q = weight.astype(jnp.bfloat16).astype(jnp.float32)
    ref_bf16 = _reference(x_q, w_q, bias, stride, padding, dilation)
    assert out.shape == ref_bf16.shape == (N, Cout, H, W)
    assert jnp.allclose(out, ref_bf16, atol=5e-3, rtol=5e-3), \
        f"bf16 max abs err = {jnp.max(jnp.abs(out - ref_bf16))}"

    # 3) Stride-2 / no-padding variant exercises the ragged-tail (padded) tile.
    out_s2 = fuzzy_conv2d(x, weight, bias, stride=2, padding=0, dilation=1,
                          compute_dtype=jnp.float32)
    out_s2 = jax.block_until_ready(out_s2)
    ref_s2 = _reference(x, weight, bias, 2, 0, 1)
    assert out_s2.shape == ref_s2.shape
    assert jnp.allclose(out_s2, ref_s2, atol=1e-4, rtol=1e-4), \
        f"stride-2 max abs err = {jnp.max(jnp.abs(out_s2 - ref_s2))}"

    print("KERNEL_OK")
</pallas_src>

<mosaic_0001>
module attributes {stable_mosaic.version = 11 : i64} {
  func.func @_fuzzy_conv_kernel(%arg0: i32, %arg1: i32, %arg2: memref<1x36x128xf32, #tpu.memory_space<vmem>>, %arg3: memref<8x36xf32, #tpu.memory_space<vmem>>, %arg4: memref<8x1xf32, #tpu.memory_space<vmem>>, %arg5: memref<1x8x128xf32, #tpu.memory_space<vmem>>) attributes {dimension_semantics = [#tpu.dimension_semantics<parallel>, #tpu.dimension_semantics<parallel>], iteration_bounds = array<i64: 2, 2>, scalar_prefetch = 0 : i64, scratch_operands = 0 : i64, tpu.core_type = #tpu.core_type<tc>, window_params = [{transform_indices = @transform_0, window_bounds = array<i64: 1, 36, 128>}, {pipeline_mode = #tpu.pipeline_mode<synchronous>, transform_indices = @transform_1, window_bounds = array<i64: 8, 36>}, {pipeline_mode = #tpu.pipeline_mode<synchronous>, transform_indices = @transform_2, window_bounds = array<i64: 8, 1>}, {transform_indices = @transform_3, window_bounds = array<i64: 1, 8, 128>}]} {
    %c0 = arith.constant 0 : index
    %c0_0 = arith.constant 0 : index
    %c0_1 = arith.constant 0 : index
    %0 = vector.load %arg2[%c0, %c0_0, %c0_1] : memref<1x36x128xf32, #tpu.memory_space<vmem>>, vector<1x36x128xf32>
    %1 = vector.shape_cast %0 : vector<1x36x128xf32> to vector<36x128xf32>
    %c0_2 = arith.constant 0 : index
    %c0_3 = arith.constant 0 : index
    %2 = vector.load %arg3[%c0_2, %c0_3] : memref<8x36xf32, #tpu.memory_space<vmem>>, vector<8x36xf32>
    %cst = arith.constant dense<0.000000e+00> : vector<8x128xf32>
    %3 = tpu.matmul %2, %1, %cst {dimension_numbers = #tpu.dot_dimension_numbers<[1], [0], [0], [1], [0, 0, 1, 1], [], []>} : vector<8x36xf32>, vector<36x128xf32>, vector<8x128xf32> -> vector<8x128xf32>
    %c0_4 = arith.constant 0 : index
    %c0_5 = arith.constant 0 : index
    %4 = vector.load %arg4[%c0_4, %c0_5] : memref<8x1xf32, #tpu.memory_space<vmem>>, vector<8x1xf32>
    %5 = vector.broadcast %4 : vector<8x1xf32> to vector<8x128xf32>
    %6 = arith.addf %3, %5 : vector<8x128xf32>
    %cst_6 = arith.constant 0.000000e+00 : f32
    %7 = vector.broadcast %cst_6 : f32 to vector<8x128xf32>
    %8 = arith.subf %6, %7 : vector<8x128xf32>
    %cst_7 = arith.constant 3.33333325 : f32
    %9 = vector.broadcast %cst_7 : f32 to vector<8x128xf32>
    %10 = arith.mulf %8, %9 : vector<8x128xf32>
    %cst_8 = arith.constant 1.000000e+00 : f32
    %11 = vector.broadcast %cst_8 : f32 to vector<8x128xf32>
    %12 = arith.subf %11, %6 : vector<8x128xf32>
    %cst_9 = arith.constant 3.33333325 : f32
    %13 = vector.broadcast %cst_9 : f32 to vector<8x128xf32>
    %14 = arith.mulf %12, %13 : vector<8x128xf32>
    %15 = arith.minimumf %10, %14 : vector<8x128xf32>
    %cst_10 = arith.constant 0.000000e+00 : f32
    %16 = vector.broadcast %cst_10 : f32 to vector<8x128xf32>
    %17 = arith.maximumf %15, %16 : vector<8x128xf32>
    %c0_11 = arith.constant 0 : index
    %c0_12 = arith.constant 0 : index
    %c0_13 = arith.constant 0 : index
    %18 = vector.load %arg5[%c0_11, %c0_12, %c0_13] : memref<1x8x128xf32, #tpu.memory_space<vmem>>, vector<1x8x128xf32>
    %19 = vector.shape_cast %18 : vector<1x8x128xf32> to vector<8x128xf32>
    %20 = vector.shape_cast %17 : vector<8x128xf32> to vector<1x8x128xf32>
    tpu.vector_store %arg5[%c0_11, %c0_12, %c0_13], %20 {strides = array<i32>} : memref<1x8x128xf32, #tpu.memory_space<vmem>>, vector<1x8x128xf32>,
    return
  }
  func.func @transform_0(%arg0: i32, %arg1: i32) -> (i32, i32, i32) {
    %c0_i32 = arith.constant 0 : i32
    %c0_i32_0 = arith.constant 0 : i32
    return %arg0, %c0_i32, %arg1 : i32, i32, i32
  }
  func.func @transform_1(%arg0: i32, %arg1: i32) -> (i32, i32) {
    %c0_i32 = arith.constant 0 : i32
    %c0_i32_0 = arith.constant 0 : i32
    %c0_i32_1 = arith.constant 0 : i32
    return %c0_i32, %c0_i32_0 : i32, i32
  }
  func.func @transform_2(%arg0: i32, %arg1: i32) -> (i32, i32) {
    %c0_i32 = arith.constant 0 : i32
    %c0_i32_0 = arith.constant 0 : i32
    %c0_i32_1 = arith.constant 0 : i32
    return %c0_i32, %c0_i32_0 : i32, i32
  }
  func.func @transform_3(%arg0: i32, %arg1: i32) -> (i32, i32, i32) {
    %c0_i32 = arith.constant 0 : i32
    %c0_i32_0 = arith.constant 0 : i32
    return %arg0, %c0_i32, %arg1 : i32, i32, i32
  }
}

</mosaic_0001>

<llo_original>
// kernel: squeeze.37
$region0: #{squeeze.37}
  %s0 = inlined_call_operand.vmem [shape: f32[2,1,16,16], index: 0, kind: input, shape index: {}]
  %s1 = inlined_call_operand.vmem [shape: f32[2,1,256], index: 1, kind: output, shape index: {}]
  $region1: #{squeeze.37} parent=0
    #allocation0 [shape = 'u8[16384]{0}', space=vmem, size = 0x4000, scoped, tag = 'scoped mem for output reshape']
    %v2 = vld [vmem:[%s0] ss:$8 sm:$0xf]
    %vm3 = vcmask 130048
    %4 = vst.msk [vmem:[#allocation0] ss:$8 sm:$0xf] %vm3, %v2
    %s5 = scalar_lea.vmem %s0, 7
    %v6 = vld [vmem:[%s5] ss:$8 sm:$0xf]
    %7 = vrot.lane.b32.xlu0 %v6, 112
    %v8 = vpop.permute.xlu0 %7
    %vm9 = vcmask 1048448
    %10 = vst.msk [vmem:[#allocation0] ss:$8 sm:$0xf] %vm9, %v8
    %s11 = scalar_lea.vmem %s0, 6
    %v12 = vld [vmem:[%s11] ss:$8 sm:$0xf]
    %13 = vrot.lane.b32.xlu0 %v12, 96
    %v14 = vpop.permute.xlu0 %13
    %vm15 = vcmask 917248
    %16 = vst.msk [vmem:[#allocation0] ss:$8 sm:$0xf] %vm15, %v14
    %s17 = scalar_lea.vmem %s0, 5
    %v18 = vld [vmem:[%s17] ss:$8 sm:$0xf]
    %19 = vrot.lane.b32.xlu0 %v18, 80
    %v20 = vpop.permute.xlu0 %19
    %vm21 = vcmask 786048
    %22 = vst.msk [vmem:[#allocation0] ss:$8 sm:$0xf] %vm21, %v20
    %s23 = scalar_lea.vmem %s0, 4
    %v24 = vld [vmem:[%s23] ss:$8 sm:$0xf]
    %25 = vrot.lane.b32.xlu0 %v24, 64
    %v26 = vpop.permute.xlu0 %25
    %vm27 = vcmask 654848
    %28 = vst.msk [vmem:[#allocation0] ss:$8 sm:$0xf] %vm27, %v26
    %s29 = scalar_lea.vmem %s0, 3
    %v30 = vld [vmem:[%s29] ss:$8 sm:$0xf]
    %31 = vrot.lane.b32.xlu0 %v30, 48
    %v32 = vpop.permute.xlu0 %31
    %vm33 = vcmask 523648
    %34 = vst.msk [vmem:[#allocation0] ss:$8 sm:$0xf] %vm33, %v32
    %s35 = scalar_lea.vmem %s0, 2
    %v36 = vld [vmem:[%s35] ss:$8 sm:$0xf]
    %37 = vrot.lane.b32.xlu0 %v36, 32
    %v38 = vpop.permute.xlu0 %37
    %vm39 = vcmask 392448
    %40 = vst.msk [vmem:[#allocation0] ss:$8 sm:$0xf] %vm39, %v38
    %s41 = scalar_lea.vmem %s0, 1
    %v42 = vld [vmem:[%s41] ss:$8 sm:$0xf]
    %43 = vrot.lane.b32.xlu0 %v42, 16
    %v44 = vpop.permute.xlu0 %43
    %vm45 = vcmask 261248
    %46 = vst.msk [vmem:[#allocation0] ss:$8 sm:$0xf] %vm45, %v44
    %s48 = sshll.u32 1, 1
    %s49 = ssub.s32 %s48, 1
    %v51 = vld [vmem:[#allocation0] sm:%s49]
    %s52 = sshll.u32 1, 1
    %s53 = ssub.s32 %s52, 1
    %54 = vst [vmem:[%s1] sm:%s53] %v51
    %s55 = scalar_lea.vmem [#allocation0], 8
    %v56 = vld [vmem:[%s55] sm:%s49]
    %s57 = sshll.u32 1, 1
    %s58 = ssub.s32 %s57, 1
    %s59 = scalar_lea.vmem %s1, 1
    %60 = vst [vmem:[%s59] sm:%s58] %v56
    %s61 = scalar_lea.vmem [#allocation0], 16
    %v62 = vld [vmem:[%s61] sm:%s49]
    %s63 = sshll.u32 1, 1
    %s64 = ssub.s32 %s63, 1
    %s65 = smul.addr 1, 2
    %s66 = scalar_lea.vmem %s1, %s65
    %67 = vst [vmem:[%s66] sm:%s64] %v62
    %s68 = scalar_lea.vmem [#allocation0], 24
    %v69 = vld [vmem:[%s68] sm:%s49]
    %s70 = sshll.u32 1, 1
    %s71 = ssub.s32 %s70, 1
    %s72 = smul.addr 1, 3
    %s73 = scalar_lea.vmem %s1, %s72
    %74 = vst [vmem:[%s73] sm:%s71] %v69

// kernel: fuzzy_conv2d.1
$region0: #{fuzzy_conv2d.1}
  #allocation0 [shape = 'u32[]', space=smem, size = 0x4, offset = 0x4, fixed_abs, tag = 'smem constant byte address 0x4 - core index']
  #allocation1 [shape = 'u32[144,128]{1,0:T(1,128)}', space=vmem, size = 0x12000, scoped, tag = 'internal scratch']
  %s0 = inlined_call_operand.vmem [shape: f32[2,36,256], index: 0, kind: input, shape index: {}]
  %s1 = inlined_call_operand.vmem [shape: f32[8,36], index: 1, kind: input, shape index: {}]
  %s2 = inlined_call_operand.vmem [shape: f32[8,1], index: 2, kind: input, shape index: {}]
  %s3 = inlined_call_operand.vmem [shape: f32[2,8,256], index: 3, kind: output, shape index: {}]
  %s4 = sld [smem:[#allocation0]]
  $region83: #{fuzzy_conv2d.1} parent=0
    _
  %s6 = ssub.s32 1, %s4
  %s7 = scalar_select 0, %s6, %s4
  $region1: #{fuzzy_conv2d.1} parent=0
    #allocation2 [shape = 'u8[40960]{0}', space=vmem, size = 0xa000, scoped, tag = 'input window, operand 0']
    loop: start=0, step=1, limit=6
    $region2: #{fuzzy_conv2d.1} parent=1 // loop_pre_header
      _
    $region3: #{fuzzy_conv2d.1} parent=1 // loop_header
      %s9 = sphi 0, %s13
      %p10 = scmp.ge.s32.totalorder %s9, 6
      %s16 = sphi 0, %s28
      %s17 = sphi 0, %s24
      %s18 = sphi 0, %s16
      %s19 = sphi 0, %s17
      %s20 = sphi 0, %s18
      %s21 = sphi 0, %s19
      %s33 = sphi 0, %s35
      %s36 = sphi 0, %s33
      %s37 = sphi 0, %s36
      %s53 = sphi 0, %s37
      %s57 = sphi 0, %s57
      %s59 = sphi 0, %s57
      %s60 = sphi 0, %s59
      %s74 = sphi 0, %s60
      %s78 = sphi 0, %s78
      %s80 = sphi 0, %s78
      %s81 = sphi 0, %s80
      %s95 = sphi 0, %s81
      %s103 = sphi 0, %s105
      %s106 = sphi 0, %s103
      %s107 = sphi 0, %s106
      %s123 = sphi 0, %s107
    $region4: #{fuzzy_conv2d.1} parent=1 // loop_header_branch
      %12 = sbr.rel (%p10) target = $region8
    $region5: #{fuzzy_conv2d.1} parent=1 // loop_body
      %s14 = ssub.s32 %s9, 1
      %s15 = ssub.s32 %s9, 2
      %s22 = sadd.s32 1, %s17
      %p23 = scmp.ge.s32.totalorder %s22, 2
      %s24 = scalar_select %p23, 0, %s22
      %s25 = sadd.s32 1, %s16
      %s26 = scalar_select %p23, %s25, %s16
      %p27 = scmp.ge.s32.totalorder %s26, 2
      %s28 = scalar_select %p27, 0, %s26
      %s29 = ssub.s32 %s16, %s28
      %s30 = ssub.s32 %s17, %s24
      %s31 = sor.u32 %s29, %s30
      %p32 = scmp.eq.s32.totalorder %s31, 0
      %s34 = sadd.s32 %s33, 1
      %s35 = scalar_select %p32, %s33, %s34
      %p38 = pneg %p32
      %p39 = scmp.eq.s32.totalorder %s9, 3
      %p40 = por %p38, %p39
      %p41 = scmp.ne.s32.totalorder %s33, %s36
      %p42 = scmp.eq.s32.totalorder %s9, 0
      %p43 = por %p41, %p42
      %p44 = scmp.ne.s32.totalorder %s33, %s36
      %p45 = scmp.eq.s32.totalorder %s14, 3
      %p46 = por %p44, %p45
      %p47 = scmp.ne.s32.totalorder %s36, %s37
      %p48 = scmp.eq.s32.totalorder %s14, 0
      %p49 = por %p47, %p48
      %p50 = scmp.ne.s32.totalorder %s36, %s37
      %p51 = scmp.eq.s32.totalorder %s15, 3
      %p52 = por %p50, %p51
      %p54 = scmp.ne.s32.totalorder %s37, %s53
      %p55 = scmp.eq.s32.totalorder %s15, 0
      %p56 = por %p54, %p55
      %s58 = sadd.s32 %s57, 1
      %p61 = scmp.eq.s32.totalorder %s9, 3
      %p62 = scmp.ne.s32.totalorder %s57, %s59
      %p63 = scmp.eq.s32.totalorder %s9, 0
      %p64 = por %p62, %p63
      %p65 = scmp.ne.s32.totalorder %s57, %s59
      %p66 = scmp.eq.s32.totalorder %s14, 3
      %p67 = por %p65, %p66
      %p68 = scmp.ne.s32.totalorder %s59, %s60
      %p69 = scmp.eq.s32.totalorder %s14, 0
      %p70 = por %p68, %p69
      %p71 = scmp.ne.s32.totalorder %s59, %s60
      %p72 = scmp.eq.s32.totalorder %s15, 3
      %p73 = por %p71, %p72
      %p75 = scmp.ne.s32.totalorder %s60, %s74
      %p76 = scmp.eq.s32.totalorder %s15, 0
      %p77 = por %p75, %p76
      %s79 = sadd.s32 %s78, 1
      %p82 = scmp.eq.s32.totalorder %s9, 3
      %p83 = scmp.ne.s32.totalorder %s78, %s80
      %p84 = scmp.eq.s32.totalorder %s9, 0
      %p85 = por %p83, %p84
      %p86 = scmp.ne.s32.totalorder %s78, %s80
      %p87 = scmp.eq.s32.totalorder %s14, 3
      %p88 = por %p86, %p87
      %p89 = scmp.ne.s32.totalorder %s80, %s81
      %p90 = scmp.eq.s32.totalorder %s14, 0
      %p91 = por %p89, %p90
      %p92 = scmp.ne.s32.totalorder %s80, %s81
      %p93 = scmp.eq.s32.totalorder %s15, 3
      %p94 = por %p92, %p93
      %p96 = scmp.ne.s32.totalorder %s81, %s95
      %p97 = scmp.eq.s32.totalorder %s15, 0
      %p98 = por %p96, %p97
      %s99 = ssub.s32 %s16, %s28
      %s100 = ssub.s32 %s17, %s24
      %s101 = sor.u32 %s99, %s100
      %p102 = scmp.eq.s32.totalorder %s101, 0
      %s104 = sadd.s32 %s103, 1
      %s105 = scalar_select %p102, %s103, %s104
      %p108 = pneg %p102
      %p109 = scmp.eq.s32.totalorder %s9, 3
      %p110 = por %p108, %p109
      %p111 = scmp.ne.s32.totalorder %s103, %s106
      %p112 = scmp.eq.s32.totalorder %s9, 0
      %p113 = por %p111, %p112
      %p114 = scmp.ne.s32.totalorder %s103, %s106
      %p115 = scmp.eq.s32.totalorder %s14, 3
      %p116 = por %p114, %p115
      %p117 = scmp.ne.s32.totalorder %s106, %s107
      %p118 = scmp.eq.s32.totalorder %s14, 0
      %p119 = por %p117, %p118
      %p120 = scmp.ne.s32.totalorder %s106, %s107
      %p121 = scmp.eq.s32.totalorder %s15, 3
      %p122 = por %p120, %p121
      %p124 = scmp.ne.s32.totalorder %s107, %s123
      %p125 = scmp.eq.s32.totalorder %s15, 0
      %p126 = por %p124, %p125
      %p127 = scmp.le.s32.totalorder 1, %s9
      %p128 = scmp.lt.s32.totalorder %s9, 5
      %p129 = pnand %p127, %p128
      %p130 = pneg %p129
      // Predicated region
      $region9: #{fuzzy_conv2d.1} parent=5 // pred_check
        _
      $region10: #{fuzzy_conv2d.1} parent=5 // pred_check_branch
        %132 = sbr.rel (%p129) target = $region12
      $region11: #{fuzzy_conv2d.1} parent=5 // pred_region
        %s133 = ssub.s32 %s9, 1
        // Predicated region
        $region13: #{fuzzy_conv2d.1} parent=11 // pred_check
          %p134 = pneg %p70
        $region14: #{fuzzy_conv2d.1} parent=11 // pred_check_branch
          %136 = sbr.rel (%p134) target = $region16
        $region15: #{fuzzy_conv2d.1} parent=11 // pred_region
          _
        $region16: #{fuzzy_conv2d.1} parent=11 // pred_fallthru
          _
        // Predicated region
        $region17: #{fuzzy_conv2d.1} parent=11 // pred_check
          %p137 = pneg %p91
        $region18: #{fuzzy_conv2d.1} parent=11 // pred_check_branch
          %139 = sbr.rel (%p137) target = $region20
        $region19: #{fuzzy_conv2d.1} parent=11 // pred_region
          _
        $region20: #{fuzzy_conv2d.1} parent=11 // pred_fallthru
          _
      $region12: #{fuzzy_conv2d.1} parent=5 // pred_fallthru
        _
      %p140 = scmp.lt.s32.totalorder %s9, 4
      // Predicated region
      $region21: #{fuzzy_conv2d.1} parent=5 // pred_check
        %p141 = pneg %p140
      $region22: #{fuzzy_conv2d.1} parent=5 // pred_check_branch
        %143 = sbr.rel (%p141) target = $region24
      $region23: #{fuzzy_conv2d.1} parent=5 // pred_region
        // Predicated region
        $region25: #{fuzzy_conv2d.1} parent=23 // pred_check
          %p144 = pneg %p43
        $region26: #{fuzzy_conv2d.1} parent=23 // pred_check_branch
          %146 = sbr.rel (%p144) target = $region28
        $region27: #{fuzzy_conv2d.1} parent=23 // pred_region
          %s147 = sand.u32 %s33, 1
          %s148 = sand.u32 %s33, 1
          %s149 = smul.addr %s148, 40
          %s150 = scalar_lea.vmem [#allocation2], %s149
          %s151 = smul.addr %s16, 10
          %s152 = sadd.s32 %s17, %s151
          %s153 = smul.addr %s152, 8
          %s154 = scalar_lea.vmem %s0, %s153
          // Predicated region
          $region29: #{fuzzy_conv2d.1} parent=27 // pred_check
            _
          $region30: #{fuzzy_conv2d.1} parent=27 // pred_check_branch
            %156 = sbr.rel (0) target = $region32
          $region31: #{fuzzy_conv2d.1} parent=27 // pred_region
            // Predicated region
            $region33: #{fuzzy_conv2d.1} parent=31 // pred_check
              _
            $region34: #{fuzzy_conv2d.1} parent=31 // pred_check_branch
              %158 = sbr.rel (0) target = $region36
            $region35: #{fuzzy_conv2d.1} parent=31 // pred_region
              // Predicated region
              $region48: #{fuzzy_conv2d.1} parent=35 // pred_check
                _
              $region49: #{fuzzy_conv2d.1} parent=35 // pred_check_branch
                %182 = sbr.rel (0) target = $region51
              $region50: #{fuzzy_conv2d.1} parent=35 // pred_region
                loop: start=0, step=1, limit=1
                $region52: #{fuzzy_conv2d.1} parent=50 // loop_pre_header
                  _
                $region53: #{fuzzy_conv2d.1} parent=50 // loop_header
                  %s184 = sphi 0, %s188
                  %p185 = scmp.ge.s32.totalorder %s184, 1
                  %s189 = sphi %s154, %s154
                  %s190 = sphi %s150, %s150
                $region54: #{fuzzy_conv2d.1} parent=50 // loop_header_branch
                  %187 = sbr.rel (%p185) target = $region58
                $region55: #{fuzzy_conv2d.1} parent=50 // loop_body
                  %v191 = vld [vmem:[%s189] sm:$0xff]
                  %192 = vst [vmem:[%s190] sm:$0xff] %v191
                  %v193 = vld [vmem:[%s189 + $0x10] sm:$0xff]
                  %194 = vst [vmem:[%s190 + $0x8] sm:$0xff] %v193
                  %v195 = vld [vmem:[%s189 + $0x20] sm:$0xff]
                  %196 = vst [vmem:[%s190 + $0x10] sm:$0xff] %v195
                  %v197 = vld [vmem:[%s189 + $0x30] sm:$0xff]
                  %198 = vst [vmem:[%s190 + $0x18] sm:$0xff] %v197
                  %v199 = vld [vmem:[%s189 + $0x40] sm:$0xff]
                  %200 = vst [vmem:[%s190 + $0x20] sm:$0xff] %v199
                $region56: #{fuzzy_conv2d.1} parent=50 // loop_footer
                  %s188 = sadd.s32 1, %s184
                $region57: #{fuzzy_conv2d.1} parent=50 // loop_footer_branch
                  %183 = sbr.rel target = $region53
                $region58: #{fuzzy_conv2d.1} parent=50 // loop_exit
                  _
              $region51: #{fuzzy_conv2d.1} parent=35 // pred_fallthru
                _
              // Predicated region
              $region59: #{fuzzy_conv2d.1} parent=35 // pred_check
                _
              $region60: #{fuzzy_conv2d.1} parent=35 // pred_check_branch
                %202 = sbr.rel target = $region62
              $region61: #{fuzzy_conv2d.1} parent=35 // pred_region
                _
              $region62: #{fuzzy_conv2d.1} parent=35 // pred_fallthru
                _
            $region36: #{fuzzy_conv2d.1} parent=31 // pred_fallthru
              _
            // Predicated region
            $region37: #{fuzzy_conv2d.1} parent=31 // pred_check
              _
            $region38: #{fuzzy_conv2d.1} parent=31 // pred_check_branch
              %160 = sbr.rel target = $region40
            $region39: #{fuzzy_conv2d.1} parent=31 // pred_region
              %s162 = ssub.s32 256, 1
              loop: start=0, step=1, limit=1
              $region41: #{fuzzy_conv2d.1} parent=39 // loop_pre_header
                _
              $region42: #{fuzzy_conv2d.1} parent=39 // loop_header
                %s164 = sphi 0, %s168
                %p165 = scmp.ge.s32.totalorder %s164, 1
                %s169 = sphi %s154, %s154
                %s170 = sphi %s150, %s150
              $region43: #{fuzzy_conv2d.1} parent=39 // loop_header_branch
                %167 = sbr.rel (%p165) target = $region47
              $region44: #{fuzzy_conv2d.1} parent=39 // loop_body
                %v171 = vld [vmem:[%s169] sm:%s162]
                %172 = vst [vmem:[%s170] sm:%s162] %v171
                %v173 = vld [vmem:[%s169 + $0x10] sm:%s162]
                %174 = vst [vmem:[%s170 + $0x8] sm:%s162] %v173
                %v175 = vld [vmem:[%s169 + $0x20] sm:%s162]
                %176 = vst [vmem:[%s170 + $0x10] sm:%s162] %v175
                %v177 = vld [vmem:[%s169 + $0x30] sm:%s162]
                %178 = vst [vmem:[%s170 + $0x18] sm:%s162] %v177
                %v179 = vld [vmem:[%s169 + $0x40] sm:%s162]
                %180 = vst [vmem:[%s170 + $0x20] sm:%s162] %v179
              $region45: #{fuzzy_conv2d.1} parent=39 // loop_footer
                %s168 = sadd.s32 1, %s164
              $region46: #{fuzzy_conv2d.1} parent=39 // loop_footer_branch
                %163 = sbr.rel target = $region42
              $region47: #{fuzzy_conv2d.1} parent=39 // loop_exit
                _
            $region40: #{fuzzy_conv2d.1} parent=31 // pred_fallthru
              _
          $region32: #{fuzzy_conv2d.1} parent=27 // pred_fallthru
            _
          %203 = vnop
        $region28: #{fuzzy_conv2d.1} parent=23 // pred_fallthru
          _
      $region24: #{fuzzy_conv2d.1} parent=5 // pred_fallthru
        _
      %p204 = scmp.le.s32.totalorder 1, %s9
      %p205 = scmp.lt.s32.totalorder %s9, 5
      %p206 = pnand %p204, %p205
      %p207 = pneg %p206
      // Predicated region
      $region63: #{fuzzy_conv2d.1} parent=5 // pred_check
        _
      $region64: #{fuzzy_conv2d.1} parent=5 // pred_check_branch
        %209 = sbr.rel (%p206) target = $region66
      $region65: #{fuzzy_conv2d.1} parent=5 // pred_region
        %s210 = ssub.s32 %s9, 1
        %s211 = sand.u32 %s36, 1
        %s212 = sand.u32 %s36, 1
        %s213 = smul.addr %s212, 40
        %s214 = scalar_lea.vmem [#allocation2], %s213
        // Predicated region
        $region67: #{fuzzy_conv2d.1} parent=65 // pred_check
          %p215 = pneg %p49
        $region68: #{fuzzy_conv2d.1} parent=65 // pred_check_branch
          %217 = sbr.rel (%p215) target = $region70
        $region69: #{fuzzy_conv2d.1} parent=65 // pred_region
          _
        $region70: #{fuzzy_conv2d.1} parent=65 // pred_fallthru
          _
        %s218 = sand.u32 %s36, 1
        %s219 = sand.u32 %s36, 1
        %s220 = smul.addr %s219, 40
        %s221 = scalar_lea.vmem [#allocation2], %s220
        %p222 = pneg %p49
        %p223 = pneg %p46
        %p224 = pneg %p70
        %p225 = pneg %p67
        %p226 = pneg %p91
        %p227 = pneg %p88
        %p228 = pneg %p119
        %p229 = pneg %p116
        %p230 = scmp.lt.s32.totalorder %s18, 1
        %s231 = scalar_select %p230, %s18, 1
        %p232 = scmp.lt.s32.totalorder %s19, 1
        %s233 = scalar_select %p232, %s19, 1
        %s234 = smul.addr %s231, 2
        %s235 = sadd.s32 %s233, %s234
        %s236 = smul.addr %s235, 8
        %s237 = scalar_lea.vmem %s3, %s236
        %p238 = scmp.lt.s32.totalorder %s18, 1
        %s239 = scalar_select %p238, %s18, 1
        %p240 = scmp.lt.s32.totalorder %s19, 1
        %s241 = scalar_select %p240, %s19, 1
        %s242 = smul.addr %s239, 2
        %s243 = sadd.s32 %s241, %s242
        %s244 = smul.addr %s243, 8
        %s245 = scalar_lea.vmem %s3, %s244
        %v246 = vld [vmem:[%s214] sm:$0xff]
        %v247 = vld [vmem:[%s214 + $0x8] sm:$0xff]
        %v248 = vld [vmem:[%s214 + $0x10] sm:$0xff]
        %v249 = vld [vmem:[%s214 + $0x18] sm:$0xff]
        %v250 = vld [vmem:[%s214 + $0x20] sm:$0xf]
        %v251 = vld [vmem:[%s1] sm:$0xff]
        %v252 = vld [vmem:[%s2] sm:$0xff]
        %254 = vset.pattern.permute.xlu0 0
        %255 = vperm.xlu0 %254, %v252
        %v256 = vpop.permute.xlu0 %255
        %vm258 = vcmask 293888
        %v260 = vsel %vm258, %v251, 0
        %vm262 = vcmask 1043456
        %v264 = vsel %vm262, %v250, 0
        %266 = vmatprep.subr.mxu0 0.0
        %267 = vmatpush1.msra.mxu0 0.0
        %268 = vmatprep.subr.mxu0 0.0
        %269 = vmatpush1.msra.mxu0 0.0
        %270 = vmatprep.subr.mxu0 0.0
        %271 = vmatpush1.msra.mxu0 0.0
        %272 = vmatprep.subr.mxu0 0.0
        %273 = vmatpush1.msra.mxu0 0.0
        %274 = vmatprep.subr.mxu0 0.0
        %275 = vmatpush1.msra.mxu0 0.0
        %276 = vmatprep.subr.mxu0 0.0
        %277 = vmatpush1.msra.mxu0 0.0
        %278 = vmatprep.subr.mxu0 0.0
        %279 = vmatpush1.msra.mxu0 0.0
        %280 = vmatprep.subr.mxu0 0.0
        %281 = vmatpush1.msra.mxu0 0.0
        %282 = vmatprep.subr.mxu0 0.0
        %283 = vmatpush1.msra.mxu0 0.0
        %284 = vmatprep.subr.mxu0 0.0
        %285 = vmatpush1.msra.mxu0 0.0
        %286 = vmatprep.subr.mxu0 0.0
        %287 = vmatpush1.msra.mxu0 0.0
        %288 = vmatprep.subr.mxu0 0.0
        %289 = vmatpush1.msra.mxu0 %v264
        %290 = vmatprep.subr.mxu0 0.0
        %291 = vmatpush1.msra.mxu0 %v249
        %292 = vmatprep.subr.mxu0 0.0
        %293 = vmatpush1.msra.mxu0 %v248
        %294 = vmatprep.subr.mxu0 0.0
        %295 = vmatpush1.msra.mxu0 %v247
        %296 = vmatprep.subr.mxu0 0.0
        %297 = vmatpush1.msra.mxu0 %v246
        %298 = vmatprep.subr.mxu0 0.0
        %299 = vmatpush2.msra.mxu0 0.0
        %300 = vmatprep.subr.mxu0 0.0
        %301 = vmatpush2.msra.mxu0 0.0
        %302 = vmatprep.subr.mxu0 0.0
        %303 = vmatpush2.msra.mxu0 0.0
        %304 = vmatprep.subr.mxu0 0.0
        %305 = vmatpush2.msra.mxu0 0.0
        %306 = vmatprep.subr.mxu0 0.0
        %307 = vmatpush2.msra.mxu0 0.0
        %308 = vmatprep.subr.mxu0 0.0
        %309 = vmatpush2.msra.mxu0 0.0
        %310 = vmatprep.subr.mxu0 0.0
        %311 = vmatpush2.msra.mxu0 0.0
        %312 = vmatprep.subr.mxu0 0.0
        %313 = vmatpush2.msra.mxu0 0.0
        %314 = vmatprep.subr.mxu0 0.0
        %315 = vmatpush2.msra.mxu0 0.0
        %316 = vmatprep.subr.mxu0 0.0
        %317 = vmatpush2.msra.mxu0 0.0
        %318 = vmatprep.subr.mxu0 0.0
        %319 = vmatpush2.msra.mxu0 0.0
        %320 = vmatprep.subr.mxu0 0.0
        %321 = vmatpush2.msra.mxu0 0.0
        %322 = vmatprep.subr.mxu0 0.0
        %323 = vmatpush2.msra.mxu0 0.0
        %324 = vmatprep.subr.mxu0 0.0
        %325 = vmatpush2.msra.mxu0 0.0
        %326 = vmatprep.subr.mxu0 0.0
        %327 = vmatpush2.msra.mxu0 0.0
        %328 = vmatprep.subr.mxu0 0.0
        %329 = vmatpush2.msra.mxu0 0.0
        %330 = vmatprep.mubr.f32.mxu0 0.0
        %331 = vmatmul.mubr.f32.gmra.mxu0 %v260
        %v332 = vpop.f32.mrf.mxu0
        %v333 = vadd.f32 %v256, %v332
        %v334 = vpop.f32.mrf.mxu0
        %335 = vdwg.mxu0
        %v336 = vmul.f32 %v333, 3.3333333
        %v337 = vsub.f32 1.0, %v333
        %v338 = vmul.f32 %v337, 3.3333333
        %v339 = vmin.f32 %v336, %v338
        %v340 = vmax.f32 %v339, 0.0
        %341 = vst [vmem:[%s245] sm:$0xff] %v340
        %p342 = scmp.lt.s32.totalorder %s18, 1
        %s343 = scalar_select %p342, %s18, 1
        %p344 = scmp.lt.s32.totalorder %s19, 1
        %s345 = scalar_select %p344, %s19, 1
        %s346 = smul.addr %s343, 2
        %s347 = sadd.s32 %s345, %s346
        %s348 = smul.addr %s347, 8
        %s349 = scalar_lea.vmem %s3, %s348
        // Predicated region
        $region71: #{fuzzy_conv2d.1} parent=65 // pred_check
          %p350 = pneg %p116
        $region72: #{fuzzy_conv2d.1} parent=65 // pred_check_branch
          %352 = sbr.rel (%p350) target = $region74
        $region73: #{fuzzy_conv2d.1} parent=65 // pred_region
          _
        $region74: #{fuzzy_conv2d.1} parent=65 // pred_fallthru
          _
      $region66: #{fuzzy_conv2d.1} parent=5 // pred_fallthru
        _
      %p353 = scmp.le.s32.totalorder 2, %s9
      // Predicated region
      $region75: #{fuzzy_conv2d.1} parent=5 // pred_check
        %p354 = pneg %p353
      $region76: #{fuzzy_conv2d.1} parent=5 // pred_check_branch
        %356 = sbr.rel (%p354) target = $region78
      $region77: #{fuzzy_conv2d.1} parent=5 // pred_region
        %s357 = ssub.s32 %s9, 2
        // Predicated region
        $region79: #{fuzzy_conv2d.1} parent=77 // pred_check
          %p358 = pneg %p122
        $region80: #{fuzzy_conv2d.1} parent=77 // pred_check_branch
          %360 = sbr.rel (%p358) target = $region82
        $region81: #{fuzzy_conv2d.1} parent=77 // pred_region
          %p361 = scmp.lt.s32.totalorder %s20, 1
          %s362 = scalar_select %p361, %s20, 1
          %p363 = scmp.lt.s32.totalorder %s21, 1
          %s364 = scalar_select %p363, %s21, 1
          %s365 = smul.addr %s362, 2
          %s366 = sadd.s32 %s364, %s365
          %s367 = smul.addr %s366, 8
          %s368 = scalar_lea.vmem %s3, %s367
        $region82: #{fuzzy_conv2d.1} parent=77 // pred_fallthru
          _
      $region78: #{fuzzy_conv2d.1} parent=5 // pred_fallthru
        _
    $region6: #{fuzzy_conv2d.1} parent=1 // loop_footer
      %s13 = sadd.s32 1, %s9
    $region7: #{fuzzy_conv2d.1} parent=1 // loop_footer_branch
      %8 = sbr.rel target = $region3
    $region8: #{fuzzy_conv2d.1} parent=1 // loop_exit
      _

</llo_original>
